<compile_context>
chip_gen: v7x
topology: tpu7x:2x2x1
jax: 0.10.0
libtpu: 0.0.40
codegen_flags: <defaults>
</compile_context>

<pallas_src>
import functools

import jax
import jax.numpy as jnp
from jax import lax
from jax.experimental import pallas as pl
from jax.experimental.pallas import tpu as pltpu


# ----------------------------------------------------------------------------
# Pallas kernel: combine adjacency + self-loops + node validity
# (+ optional extra pair-allow).  One (tile_q, N) plane per grid step.
# ----------------------------------------------------------------------------
def _graph_mask_kernel(adj_ref, allow_col_ref, allow_row_ref, *rest,
                       add_self_loop, has_extra):
    if has_extra:
        extra_ref, out_ref = rest
    else:
        (out_ref,) = rest

    tq, n = adj_ref.shape
    adj = adj_ref[...] != 0            # (tq, n) graph edges
    col = allow_col_ref[...] != 0      # (tq, 1) query-node validity
    row = allow_row_ref[...] != 0      # (1, n)  key-node validity

    if add_self_loop:
        # Global query-row offset: keeps the diagonal correct under q-tiling.
        q0 = pl.program_id(1) * tq
        row_ids = q0 + lax.broadcasted_iota(jnp.int32, (tq, n), 0)
        col_ids = lax.broadcasted_iota(jnp.int32, (tq, n), 1)
        adj = adj | (row_ids == col_ids)

    allow = adj & col & row
    if has_extra:
        allow = allow & (extra_ref[...] != 0)
    out_ref[...] = allow.astype(out_ref.dtype)


def _pick_tile_q(n, n_planes, budget_bytes=24 << 20):
    """Largest query tile whose double-buffered int8 working set fits budget.

    n_planes = number of (tile_q, N) int8 streams per step (adj [+extra] + out).
    """
    if n % 8 != 0 or 2 * n_planes * n * n <= budget_bytes:
        # Either untileable along the sublane axis (block dim must be a
        # multiple of 8 or the full dim) or already comfortably small.
        return n
    tile = n
    for t in (2048, 1024, 512, 256, 128):
        if n % t == 0:
            tile = t
            if 2 * n_planes * t * n <= budget_bytes:
                break
    return tile


def graph_sdpa_mask_pallas(adj_i8, node_allow_i32, extra_i8=None, *,
                           add_self_loop=True):
    """adj_i8: [B,N,N] int8 (nonzero = edge); node_allow_i32: [B,N] int32
    (nonzero = valid and not key-padded); extra_i8: optional [B,N,N] int8.

    Returns an int8 mask [B, N, N] (1 = attention allowed).  The head axis is
    intentionally NOT materialized here: broadcast it for free in the caller.
    """
    B, N, _ = adj_i8.shape
    has_extra = extra_i8 is not None
    n_planes = 3 if has_extra else 2
    tile_q = _pick_tile_q(N, n_planes)
    n_q = N // tile_q

    allow_col = node_allow_i32.reshape(B, N, 1)   # query-node validity
    allow_row = node_allow_i32.reshape(B, 1, N)   # key-node validity

    kernel = functools.partial(_graph_mask_kernel,
                               add_self_loop=add_self_loop,
                               has_extra=has_extra)

    in_specs = [
        pl.BlockSpec((None, tile_q, N), lambda b, qi: (b, qi, 0)),
        pl.BlockSpec((None, tile_q, 1), lambda b, qi: (b, qi, 0)),
        pl.BlockSpec((None, 1, N), lambda b, qi: (b, 0, 0)),
    ]
    operands = [adj_i8, allow_col, allow_row]
    if has_extra:
        in_specs.append(pl.BlockSpec((None, tile_q, N), lambda b, qi: (b, qi, 0)))
        operands.append(extra_i8)

    # Double-buffered int8 working set per step; only raise the scoped VMEM
    # limit when the tiles are actually large.
    est_bytes = 2 * n_planes * tile_q * N + (1 << 16)
    compiler_kwargs = dict(dimension_semantics=("parallel", "parallel"))
    if est_bytes > (12 << 20):
        compiler_kwargs["vmem_limit_bytes"] = min(2 * est_bytes, 64 << 20)

    out = pl.pallas_call(
        kernel,
        out_shape=jax.ShapeDtypeStruct((B, N, N), jnp.int8),
        grid=(B, n_q),
        in_specs=in_specs,
        out_specs=pl.BlockSpec((None, tile_q, N), lambda b, qi: (b, qi, 0)),
        compiler_params=pltpu.CompilerParams(**compiler_kwargs),
    )(*operands)
    return out


# ----------------------------------------------------------------------------
# Plain-JAX glue replicating PyG's to_dense_batch / to_dense_adj
# ----------------------------------------------------------------------------
def to_dense_batch_jax(x, batch_vec, ptr, B, Nmax, fill_value=0.0):
    n_total = x.shape[0]
    idx_in_graph = jnp.arange(n_total, dtype=jnp.int32) - ptr[batch_vec]
    gindex = batch_vec * Nmax + idx_in_graph
    dense = jnp.full((B * Nmax, x.shape[1]), fill_value, x.dtype)
    dense = dense.at[gindex].set(x).reshape(B, Nmax, x.shape[1])
    valid = jnp.zeros((B * Nmax,), jnp.bool_).at[gindex].set(True)
    return dense, valid.reshape(B, Nmax), gindex


def to_dense_adj_jax(edge_index, batch_vec, ptr, B, Nmax):
    # Boolean adjacency semantics (original does .add then .bool()); int8 keeps
    # the big [B,N,N] read 4x narrower than int32.
    src, dst = edge_index[0], edge_index[1]
    eb = batch_vec[src]
    r = src - ptr[eb]
    c = dst - ptr[eb]
    return jnp.zeros((B, Nmax, Nmax), jnp.int8).at[eb, r, c].set(1)


def graph_sdpa_mask_forward(x, batch_vec, ptr, edge_index, num_graphs,
                            want_heads=None, extra_pair_allow=None,
                            key_padding_mask=None,
                            add_self_loop=True, pad_fill=0.0,
                            max_num_nodes=None):
    """Mirrors GraphSDPAMask.forward: returns (dense_x, attn_mask)."""
    B = num_graphs
    # Pass max_num_nodes statically when running under jit (jnp.max syncs).
    Nmax = (int(jnp.max(ptr[1:] - ptr[:-1])) if max_num_nodes is None
            else int(max_num_nodes))

    dense_x, node_valid, _ = to_dense_batch_jax(
        x, batch_vec, ptr, B, Nmax, fill_value=pad_fill)
    adj = to_dense_adj_jax(edge_index, batch_vec, ptr, B, Nmax)

    node_allow = node_valid
    if key_padding_mask is not None:  # old semantics: True = mask out
        node_allow = node_allow & jnp.logical_not(key_padding_mask)

    extra_i8 = None
    if extra_pair_allow is not None:
        extra_i8 = jnp.broadcast_to(
            extra_pair_allow.astype(jnp.int8), (B, Nmax, Nmax))

    mask_i8 = graph_sdpa_mask_pallas(
        adj, node_allow.astype(jnp.int32), extra_i8,
        add_self_loop=add_self_loop)

    allow_bool = mask_i8 != 0                         # [B, N, N], 1 byte/elem
    H = 1 if want_heads is None else want_heads
    attn_mask = jnp.broadcast_to(allow_bool[:, None], (B, H, Nmax, Nmax))
    # TODO(synk): return_float_bias / pair_bias handling is pure broadcast /
    # reshape plumbing; it stays in plain JAX and is not kernel work.
    return dense_x, attn_mask


# ----------------------------------------------------------------------------
# Demo / self-check
# ----------------------------------------------------------------------------
if __name__ == "__main__":
    key = jax.random.PRNGKey(0)

    graph_sizes = [6, 8]          # two graphs in the batch
    B = len(graph_sizes)
    F = 32                        # node feature dim
    H = 4                         # attention heads
    N_total = sum(graph_sizes)

    ptr = jnp.array([0, 6, 14], dtype=jnp.int32)
    batch_vec = jnp.concatenate(
        [jnp.full((s,), g, jnp.int32) for g, s in enumerate(graph_sizes)])

    kx, key = jax.random.split(key)
    x = jax.random.normal(kx, (N_total, F), jnp.float32)

    # deterministic random intra-graph edges
    edges = []
    for g, s in enumerate(graph_sizes):
        k1, k2, key = jax.random.split(key, 3)
        e = 2 * s
        src = jax.random.randint(k1, (e,), 0, s, dtype=jnp.int32) + int(ptr[g])
        dst = jax.random.randint(k2, (e,), 0, s, dtype=jnp.int32) + int(ptr[g])
        edges.append(jnp.stack([src, dst]))
    edge_index = jnp.concatenate(edges, axis=1)

    # ---- path 1: plain graph mask, broadcast to H heads ----
    dense_x, attn_mask = graph_sdpa_mask_forward(
        x, batch_vec, ptr, edge_index, num_graphs=B, want_heads=H)
    jax.block_until_ready(attn_mask)

    # ---- path 2: with extra_pair_allow (exercises the has_extra variant) ----
    Nmax = max(graph_sizes)
    kex, key = jax.random.split(key)
    extra = jax.random.bernoulli(kex, 0.7, (B, Nmax, Nmax))
    _, attn_mask_extra = graph_sdpa_mask_forward(
        x, batch_vec, ptr, edge_index, num_graphs=B, want_heads=None,
        extra_pair_allow=extra)
    jax.block_until_ready(attn_mask_extra)

    # ---- pure-JAX reference check ----
    _, node_valid_ref, _ = to_dense_batch_jax(x, batch_vec, ptr, B, Nmax)
    adj_ref = to_dense_adj_jax(edge_index, batch_vec, ptr, B, Nmax) != 0
    adj_ref = adj_ref | jnp.eye(Nmax, dtype=bool)[None]
    pair_valid = node_valid_ref[:, :, None] & node_valid_ref[:, None, :]
    base = adj_ref & pair_valid
    ref = jnp.broadcast_to(base[:, None], (B, H, Nmax, Nmax))
    ref_extra = (base & extra)[:, None]

    assert attn_mask.shape == (B, H, Nmax, Nmax)
    assert attn_mask.dtype == jnp.bool_
    assert dense_x.shape == (B, Nmax, F)
    assert bool(jnp.all(attn_mask == ref))
    assert attn_mask_extra.shape == (B, 1, Nmax, Nmax)
    assert bool(jnp.all(attn_mask_extra == ref_extra))

    print("KERNEL_OK")
</pallas_src>

<mosaic_0001>
module attributes {stable_mosaic.version = 11 : i64} {
  func.func @_graph_mask_kernel(%arg0: i32, %arg1: i32, %arg2: memref<1x8x8xi8, #tpu.memory_space<vmem>>, %arg3: memref<1x8x1xi32, #tpu.memory_space<vmem>>, %arg4: memref<1x1x8xi32, #tpu.memory_space<vmem>>, %arg5: memref<1x8x8xi8, #tpu.memory_space<vmem>>) attributes {dimension_semantics = [#tpu.dimension_semantics<parallel>, #tpu.dimension_semantics<parallel>], iteration_bounds = array<i64: 2, 1>, scalar_prefetch = 0 : i64, scratch_operands = 0 : i64, tpu.core_type = #tpu.core_type<tc>, window_params = [{transform_indices = @transform_0, window_bounds = array<i64: 1, 8, 8>}, {transform_indices = @transform_1, window_bounds = array<i64: 1, 8, 1>}, {transform_indices = @transform_2, window_bounds = array<i64: 1, 1, 8>}, {transform_indices = @transform_3, window_bounds = array<i64: 1, 8, 8>}]} {
    %c0 = arith.constant 0 : index
    %c0_0 = arith.constant 0 : index
    %c0_1 = arith.constant 0 : index
    %0 = vector.load %arg2[%c0, %c0_0, %c0_1] : memref<1x8x8xi8, #tpu.memory_space<vmem>>, vector<1x8x8xi8>
    %1 = vector.shape_cast %0 : vector<1x8x8xi8> to vector<8x8xi8>
    %c0_i8 = arith.constant 0 : i8
    %2 = vector.broadcast %c0_i8 : i8 to vector<8x8xi8>
    %3 = arith.cmpi ne, %1, %2 : vector<8x8xi8>
    %c0_2 = arith.constant 0 : index
    %c0_3 = arith.constant 0 : index
    %c0_4 = arith.constant 0 : index
    %4 = vector.load %arg3[%c0_2, %c0_3, %c0_4] : memref<1x8x1xi32, #tpu.memory_space<vmem>>, vector<1x8x1xi32>
    %5 = vector.shape_cast %4 : vector<1x8x1xi32> to vector<8x1xi32>
    %c0_i32 = arith.constant 0 : i32
    %6 = vector.broadcast %c0_i32 : i32 to vector<8x1xi32>
    %7 = arith.cmpi ne, %5, %6 : vector<8x1xi32>
    %c0_5 = arith.constant 0 : index
    %c0_6 = arith.constant 0 : index
    %c0_7 = arith.constant 0 : index
    %8 = vector.load %arg4[%c0_5, %c0_6, %c0_7] : memref<1x1x8xi32, #tpu.memory_space<vmem>>, vector<1x1x8xi32>
    %9 = vector.shape_cast %8 : vector<1x1x8xi32> to vector<1x8xi32>
    %c0_i32_8 = arith.constant 0 : i32
    %10 = vector.broadcast %c0_i32_8 : i32 to vector<1x8xi32>
    %11 = arith.cmpi ne, %9, %10 : vector<1x8xi32>
    %c8_i32 = arith.constant 8 : i32
    %12 = arith.muli %arg1, %c8_i32 : i32
    %13 = tpu.iota {dimensions = array<i32: 0>} : vector<8x8xi32>
    %14 = vector.broadcast %12 : i32 to vector<8x8xi32>
    %15 = arith.addi %14, %13 : vector<8x8xi32>
    %16 = tpu.iota {dimensions = array<i32: 1>} : vector<8x8xi32>
    %17 = arith.cmpi eq, %15, %16 : vector<8x8xi32>
    %18 = arith.ori %3, %17 : vector<8x8xi1>
    %19 = vector.broadcast %7 : vector<8x1xi1> to vector<8x8xi1>
    %20 = arith.andi %18, %19 : vector<8x8xi1>
    %21 = vector.broadcast %11 : vector<1x8xi1> to vector<8x8xi1>
    %22 = arith.andi %20, %21 : vector<8x8xi1>
    %23 = arith.extui %22 : vector<8x8xi1> to vector<8x8xi8>
    %c0_9 = arith.constant 0 : index
    %c0_10 = arith.constant 0 : index
    %c0_11 = arith.constant 0 : index
    %24 = vector.load %arg5[%c0_9, %c0_10, %c0_11] : memref<1x8x8xi8, #tpu.memory_space<vmem>>, vector<1x8x8xi8>
    %25 = vector.shape_cast %24 : vector<1x8x8xi8> to vector<8x8xi8>
    %26 = vector.shape_cast %23 : vector<8x8xi8> to vector<1x8x8xi8>
    tpu.vector_store %arg5[%c0_9, %c0_10, %c0_11], %26 {strides = array<i32>} : memref<1x8x8xi8, #tpu.memory_space<vmem>>, vector<1x8x8xi8>,
    return
  }
  func.func @transform_0(%arg0: i32, %arg1: i32) -> (i32, i32, i32) {
    %c0_i32 = arith.constant 0 : i32
    %c0_i32_0 = arith.constant 0 : i32
    return %arg0, %arg1, %c0_i32 : i32, i32, i32
  }
  func.func @transform_1(%arg0: i32, %arg1: i32) -> (i32, i32, i32) {
    %c0_i32 = arith.constant 0 : i32
    %c0_i32_0 = arith.constant 0 : i32
    return %arg0, %arg1, %c0_i32 : i32, i32, i32
  }
  func.func @transform_2(%arg0: i32, %arg1: i32) -> (i32, i32, i32) {
    %c0_i32 = arith.constant 0 : i32
    %c0_i32_0 = arith.constant 0 : i32
    %c0_i32_1 = arith.constant 0 : i32
    return %arg0, %c0_i32, %c0_i32_0 : i32, i32, i32
  }
  func.func @transform_3(%arg0: i32, %arg1: i32) -> (i32, i32, i32) {
    %c0_i32 = arith.constant 0 : i32
    %c0_i32_0 = arith.constant 0 : i32
    return %arg0, %arg1, %c0_i32 : i32, i32, i32
  }
}

</mosaic_0001>

<llo_original>
// kernel: tpu_custom_call.1
$region0: #{tpu_custom_call.1}
  #allocation0 [shape = 'u32[]', space=smem, size = 0x4, offset = 0x4, fixed_abs, tag = 'smem constant byte address 0x4 - core index']
  #allocation1 [shape = 'u32[144,128]{1,0:T(1,128)}', space=vmem, size = 0x12000, scoped, tag = 'internal scratch']
  %s0 = inlined_call_operand.vmem [shape: s8[2,8,8], index: 0, kind: input, shape index: {}]
  %s1 = inlined_call_operand.vmem [shape: s32[2,8,1], index: 1, kind: input, shape index: {}]
  %s2 = inlined_call_operand.vmem [shape: s32[2,1,8], index: 2, kind: input, shape index: {}]
  %s3 = inlined_call_operand.hbm [shape: s8[2,8,8], index: 3, kind: output, shape index: {}]
  %s4 = sld [smem:[#allocation0]]
  $region45: #{tpu_custom_call.1} parent=0
    _
  %s6 = ssub.s32 1, %s4
  %s7 = scalar_select 0, %s6, %s4
  $region1: #{tpu_custom_call.1} parent=0
    #allocation2 [shape = 'u8[2048]{0}', space=vmem, size = 0x800, scoped, tag = 'output window, operand 0']
    #allocation3 [shape = 's32[2]{0}', space=sflag, size = 0x8, scoped, tag = 'scoped memory for tpu_custom_call.1']
    %8 = vsyncpa [#allocation3], 0
    %s9 = scalar_lea.sflag [#allocation3], 1
    %10 = vsyncpa %s9, 0
    loop: start=0, step=1, limit=4
    $region2: #{tpu_custom_call.1} parent=1 // loop_pre_header
      _
    $region3: #{tpu_custom_call.1} parent=1 // loop_header
      %s12 = sphi 0, %s16
      %p13 = scmp.ge.s32.totalorder %s12, 4
      %s19 = sphi 0, %s31
      %s20 = sphi 0, %s27
      %s21 = sphi 0, %s19
      %s22 = sphi 0, %s20
      %s23 = sphi 0, %s21
      %s24 = sphi 0, %s22
      %s36 = sphi 0, %s38
      %s39 = sphi 0, %s36
      %s40 = sphi 0, %s39
      %s56 = sphi 0, %s40
      %s64 = sphi 0, %s66
      %s67 = sphi 0, %s64
      %s68 = sphi 0, %s67
      %s84 = sphi 0, %s68
      %s90 = sphi 0, %s92
      %s93 = sphi 0, %s90
      %s94 = sphi 0, %s93
      %s110 = sphi 0, %s94
      %s118 = sphi 0, %s120
      %s121 = sphi 0, %s118
      %s122 = sphi 0, %s121
      %s138 = sphi 0, %s122
    $region4: #{tpu_custom_call.1} parent=1 // loop_header_branch
      %15 = sbr.rel (%p13) target = $region8
    $region5: #{tpu_custom_call.1} parent=1 // loop_body
      %s17 = ssub.s32 %s12, 1
      %s18 = ssub.s32 %s12, 2
      %s25 = sadd.s32 1, %s20
      %p26 = scmp.ge.s32.totalorder %s25, 1
      %s27 = scalar_select %p26, 0, %s25
      %s28 = sadd.s32 1, %s19
      %s29 = scalar_select %p26, %s28, %s19
      %p30 = scmp.ge.s32.totalorder %s29, 2
      %s31 = scalar_select %p30, 0, %s29
      %s32 = ssub.s32 %s19, %s31
      %s33 = ssub.s32 %s20, %s27
      %s34 = sor.u32 %s32, %s33
      %p35 = scmp.eq.s32.totalorder %s34, 0
      %s37 = sadd.s32 %s36, 1
      %s38 = scalar_select %p35, %s36, %s37
      %p41 = pneg %p35
      %p42 = scmp.eq.s32.totalorder %s12, 1
      %p43 = por %p41, %p42
      %p44 = scmp.ne.s32.totalorder %s36, %s39
      %p45 = scmp.eq.s32.totalorder %s12, 0
      %p46 = por %p44, %p45
      %p47 = scmp.ne.s32.totalorder %s36, %s39
      %p48 = scmp.eq.s32.totalorder %s17, 1
      %p49 = por %p47, %p48
      %p50 = scmp.ne.s32.totalorder %s39, %s40
      %p51 = scmp.eq.s32.totalorder %s17, 0
      %p52 = por %p50, %p51
      %p53 = scmp.ne.s32.totalorder %s39, %s40
      %p54 = scmp.eq.s32.totalorder %s18, 1
      %p55 = por %p53, %p54
      %p57 = scmp.ne.s32.totalorder %s40, %s56
      %p58 = scmp.eq.s32.totalorder %s18, 0
      %p59 = por %p57, %p58
      %s60 = ssub.s32 %s19, %s31
      %s61 = ssub.s32 %s20, %s27
      %s62 = sor.u32 %s60, %s61
      %p63 = scmp.eq.s32.totalorder %s62, 0
      %s65 = sadd.s32 %s64, 1
      %s66 = scalar_select %p63, %s64, %s65
      %p69 = pneg %p63
      %p70 = scmp.eq.s32.totalorder %s12, 1
      %p71 = por %p69, %p70
      %p72 = scmp.ne.s32.totalorder %s64, %s67
      %p73 = scmp.eq.s32.totalorder %s12, 0
      %p74 = por %p72, %p73
      %p75 = scmp.ne.s32.totalorder %s64, %s67
      %p76 = scmp.eq.s32.totalorder %s17, 1
      %p77 = por %p75, %p76
      %p78 = scmp.ne.s32.totalorder %s67, %s68
      %p79 = scmp.eq.s32.totalorder %s17, 0
      %p80 = por %p78, %p79
      %p81 = scmp.ne.s32.totalorder %s67, %s68
      %p82 = scmp.eq.s32.totalorder %s18, 1
      %p83 = por %p81, %p82
      %p85 = scmp.ne.s32.totalorder %s68, %s84
      %p86 = scmp.eq.s32.totalorder %s18, 0
      %p87 = por %p85, %p86
      %s88 = ssub.s32 %s19, %s31
      %p89 = scmp.eq.s32.totalorder %s88, 0
      %s91 = sadd.s32 %s90, 1
      %s92 = scalar_select %p89, %s90, %s91
      %p95 = pneg %p89
      %p96 = scmp.eq.s32.totalorder %s12, 1
      %p97 = por %p95, %p96
      %p98 = scmp.ne.s32.totalorder %s90, %s93
      %p99 = scmp.eq.s32.totalorder %s12, 0
      %p100 = por %p98, %p99
      %p101 = scmp.ne.s32.totalorder %s90, %s93
      %p102 = scmp.eq.s32.totalorder %s17, 1
      %p103 = por %p101, %p102
      %p104 = scmp.ne.s32.totalorder %s93, %s94
      %p105 = scmp.eq.s32.totalorder %s17, 0
      %p106 = por %p104, %p105
      %p107 = scmp.ne.s32.totalorder %s93, %s94
      %p108 = scmp.eq.s32.totalorder %s18, 1
      %p109 = por %p107, %p108
      %p111 = scmp.ne.s32.totalorder %s94, %s110
      %p112 = scmp.eq.s32.totalorder %s18, 0
      %p113 = por %p111, %p112
      %s114 = ssub.s32 %s19, %s31
      %s115 = ssub.s32 %s20, %s27
      %s116 = sor.u32 %s114, %s115
      %p117 = scmp.eq.s32.totalorder %s116, 0
      %s119 = sadd.s32 %s118, 1
      %s120 = scalar_select %p117, %s118, %s119
      %p123 = pneg %p117
      %p124 = scmp.eq.s32.totalorder %s12, 1
      %p125 = por %p123, %p124
      %p126 = scmp.ne.s32.totalorder %s118, %s121
      %p127 = scmp.eq.s32.totalorder %s12, 0
      %p128 = por %p126, %p127
      %p129 = scmp.ne.s32.totalorder %s118, %s121
      %p130 = scmp.eq.s32.totalorder %s17, 1
      %p131 = por %p129, %p130
      %p132 = scmp.ne.s32.totalorder %s121, %s122
      %p133 = scmp.eq.s32.totalorder %s17, 0
      %p134 = por %p132, %p133
      %p135 = scmp.ne.s32.totalorder %s121, %s122
      %p136 = scmp.eq.s32.totalorder %s18, 1
      %p137 = por %p135, %p136
      %p139 = scmp.ne.s32.totalorder %s122, %s138
      %p140 = scmp.eq.s32.totalorder %s18, 0
      %p141 = por %p139, %p140
      %p142 = scmp.le.s32.totalorder 1, %s12
      %p143 = scmp.lt.s32.totalorder %s12, 3
      %p144 = pnand %p142, %p143
      %p145 = pneg %p144
      // Predicated region
      $region9: #{tpu_custom_call.1} parent=5 // pred_check
        _
      $region10: #{tpu_custom_call.1} parent=5 // pred_check_branch
        %147 = sbr.rel (%p144) target = $region12
      $region11: #{tpu_custom_call.1} parent=5 // pred_region
        %s148 = ssub.s32 %s12, 1
      $region12: #{tpu_custom_call.1} parent=5 // pred_fallthru
        _
      %p149 = scmp.lt.s32.totalorder %s12, 2
      // Predicated region
      $region13: #{tpu_custom_call.1} parent=5 // pred_check
        %p150 = pneg %p149
      $region14: #{tpu_custom_call.1} parent=5 // pred_check_branch
        %152 = sbr.rel (%p150) target = $region16
      $region15: #{tpu_custom_call.1} parent=5 // pred_region
        // Predicated region
        $region17: #{tpu_custom_call.1} parent=15 // pred_check
          %p153 = pneg %p46
        $region18: #{tpu_custom_call.1} parent=15 // pred_check_branch
          %155 = sbr.rel (%p153) target = $region20
        $region19: #{tpu_custom_call.1} parent=15 // pred_region
          %p156 = scmp.lt.s32.totalorder %s19, 1
          %s157 = scalar_select %p156, %s19, 1
          %p158 = scmp.lt.s32.totalorder %s20, 0
          %s159 = scalar_select %p158, %s20, 0
          %s160 = sadd.s32 %s159, %s157
          %s161 = smul.addr %s160, 2
          %s162 = scalar_lea.vmem %s0, %s161
        $region20: #{tpu_custom_call.1} parent=15 // pred_fallthru
          _
        // Predicated region
        $region21: #{tpu_custom_call.1} parent=15 // pred_check
          %p163 = pneg %p74
        $region22: #{tpu_custom_call.1} parent=15 // pred_check_branch
          %165 = sbr.rel (%p163) target = $region24
        $region23: #{tpu_custom_call.1} parent=15 // pred_region
          %p166 = scmp.lt.s32.totalorder %s19, 1
          %s167 = scalar_select %p166, %s19, 1
          %p168 = scmp.lt.s32.totalorder %s20, 0
          %s169 = scalar_select %p168, %s20, 0
          %s170 = sadd.s32 %s169, %s167
          %s171 = smul.addr %s170, 8
          %s172 = scalar_lea.vmem %s1, %s171
        $region24: #{tpu_custom_call.1} parent=15 // pred_fallthru
          _
        // Predicated region
        $region25: #{tpu_custom_call.1} parent=15 // pred_check
          %p173 = pneg %p100
        $region26: #{tpu_custom_call.1} parent=15 // pred_check_branch
          %175 = sbr.rel (%p173) target = $region28
        $region27: #{tpu_custom_call.1} parent=15 // pred_region
          %p176 = scmp.lt.s32.totalorder %s19, 1
          %s177 = scalar_select %p176, %s19, 1
          %s178 = scalar_lea.vmem %s2, %s177
        $region28: #{tpu_custom_call.1} parent=15 // pred_fallthru
          _
      $region16: #{tpu_custom_call.1} parent=5 // pred_fallthru
        _
      %p179 = scmp.le.s32.totalorder 1, %s12
      %p180 = scmp.lt.s32.totalorder %s12, 3
      %p181 = pnand %p179, %p180
      %p182 = pneg %p181
      // Predicated region
      $region29: #{tpu_custom_call.1} parent=5 // pred_check
        _
      $region30: #{tpu_custom_call.1} parent=5 // pred_check_branch
        %184 = sbr.rel (%p181) target = $region32
      $region31: #{tpu_custom_call.1} parent=5 // pred_region
        %s185 = ssub.s32 %s12, 1
        %p186 = scmp.lt.s32.totalorder %s21, 1
        %s187 = scalar_select %p186, %s21, 1
        %p188 = scmp.lt.s32.totalorder %s22, 0
        %s189 = scalar_select %p188, %s22, 0
        %s190 = sadd.s32 %s189, %s187
        %s191 = smul.addr %s190, 2
        %s192 = scalar_lea.vmem %s0, %s191
        %p193 = pneg %p52
        %p194 = pneg %p49
        %p195 = scmp.lt.s32.totalorder %s21, 1
        %s196 = scalar_select %p195, %s21, 1
        %p197 = scmp.lt.s32.totalorder %s22, 0
        %s198 = scalar_select %p197, %s22, 0
        %s199 = sadd.s32 %s198, %s196
        %s200 = smul.addr %s199, 8
        %s201 = scalar_lea.vmem %s1, %s200
        %p202 = pneg %p80
        %p203 = pneg %p77
        %p204 = scmp.lt.s32.totalorder %s21, 1
        %s205 = scalar_select %p204, %s21, 1
        %s206 = scalar_lea.vmem %s2, %s205
        %p207 = pneg %p106
        %p208 = pneg %p103
        %p209 = pneg %p134
        %p210 = pneg %p131
        %s211 = sand.u32 %s121, 1
        %s212 = scalar_lea.sflag [#allocation3], %s211
        %s213 = sand.u32 %s121, 1
        %s214 = smul.addr %s213, 2
        %s215 = scalar_lea.vmem [#allocation2], %s214
        %p216 = scmp.lt.s32.totalorder %s21, 1
        %s217 = scalar_select %p216, %s21, 1
        %p218 = scmp.lt.s32.totalorder %s22, 0
        %s219 = scalar_select %p218, %s22, 0
        %s220 = sadd.s32 %s219, %s217
        %s221 = smul.addr %s220, 2
        %s222 = scalar_lea.vmem %s0, %s221
        %p223 = scmp.lt.s32.totalorder %s21, 1
        %s224 = scalar_select %p223, %s21, 1
        %p225 = scmp.lt.s32.totalorder %s22, 0
        %s226 = scalar_select %p225, %s22, 0
        %s227 = sadd.s32 %s226, %s224
        %s228 = smul.addr %s227, 8
        %s229 = scalar_lea.vmem %s1, %s228
        %p230 = scmp.lt.s32.totalorder %s21, 1
        %s231 = scalar_select %p230, %s21, 1
        %s232 = scalar_lea.vmem %s2, %s231
        %v235 = vld [vmem:[%s222] sm:$0x3]
        %vm236 = vnez %v235
        %v237 = vld [vmem:[%s229] sm:$0xff]
        %vm238 = vcmp.ne.s32.totalorder %v237, 0
        %v239 = vld [vmem:[%s232] sm:$0x1]
        %vm240 = vcmp.ne.s32.totalorder %v239, 0
        %s241 = smul.u32 %s22, 8
        %v242 = vlaneseq
        %v243 = vshrl.u32 %v242, 7
        %v244 = vstv %s241
        %v245 = vadd.s32 %v244, %v243
        %v246 = vlaneseq
        %v247 = vand.u32 %v246, 127
        %vm248 = vcmp.eq.s32.totalorder %v245, %v247
        %vm249 = vmpackc.low %vm248, %vm248
        %vm250 = vmpackc.even %vm249, %vm249
        %vm251 = vmor %vm236, %vm250
        %v252 = vsel %vm238, 1, 0
        %253 = vset.pattern.permute.xlu0 0
        %254 = vperm.xlu0 %253, %v252
        %v255 = vpop.permute.xlu0 %254
        %vm256 = vcmp.eq.s32.totalorder %v255, 1
        %vm257 = vmpackc.low %vm256, %vm256
        %vm258 = vmpackc.even %vm257, %vm257
        %vm259 = vmand %vm251, %vm258
        %v260 = vsel %vm240, 1, 0
        %v261 = vlaneseq
        %v262 = vshrl.u32 %v261, 7
        %v263 = vsub.s32 0, %v262
        %v264 = vrot.slane %v260, %v263
        %vm265 = vcmp.eq.s32.totalorder %v264, 1
        %vm266 = vmpackc.low %vm265, %vm265
        %vm267 = vmpackc.even %vm266, %vm266
        %vm268 = vmand %vm259, %vm267
        %v269 = vsel %vm268, 16843009, 0
        %vm270 = vcmask 58368
        %271 = vst.msk [vmem:[%s215] sm:$0x3] %vm270, %v269
        %s272 = sand.u32 %s121, 1
        %s273 = scalar_lea.sflag [#allocation3], %s272
        %s274 = sand.u32 %s121, 1
        %s275 = smul.addr %s274, 2
        %s276 = scalar_lea.vmem [#allocation2], %s275
        // Predicated region
        $region33: #{tpu_custom_call.1} parent=31 // pred_check
          %p277 = pneg %p131
        $region34: #{tpu_custom_call.1} parent=31 // pred_check_branch
          %279 = sbr.rel (%p277) target = $region36
        $region35: #{tpu_custom_call.1} parent=31 // pred_region
          %s281 = ssub.s32 32, 32
          %282 = vsyncadd %s273, %s281
          %s283 = sadd.s32 %s22, %s21
          %s284 = smul.addr %s283, 32
          %s285 = scalar_lea.hbm %s3, %s284
          %s287 = sshll.u32 %s276, 4
          %s288 = int_to_ptr.vmem [resolvable:$true] %s287
          %290 = dma.vmem_to_hbm [thread:$0]  %s288, 32, %s285, %s273
        $region36: #{tpu_custom_call.1} parent=31 // pred_fallthru
          _
      $region32: #{tpu_custom_call.1} parent=5 // pred_fallthru
        _
      %p291 = scmp.le.s32.totalorder 2, %s12
      // Predicated region
      $region37: #{tpu_custom_call.1} parent=5 // pred_check
        %p292 = pneg %p291
      $region38: #{tpu_custom_call.1} parent=5 // pred_check_branch
        %294 = sbr.rel (%p292) target = $region40
      $region39: #{tpu_custom_call.1} parent=5 // pred_region
        %s295 = ssub.s32 %s12, 2
        // Predicated region
        $region41: #{tpu_custom_call.1} parent=39 // pred_check
          %p296 = pneg %p137
        $region42: #{tpu_custom_call.1} parent=39 // pred_check_branch
          %298 = sbr.rel (%p296) target = $region44
        $region43: #{tpu_custom_call.1} parent=39 // pred_region
          %s299 = sand.u32 %s122, 1
          %s300 = scalar_lea.sflag [#allocation3], %s299
          %s301 = sand.u32 %s122, 1
          %s302 = smul.addr %s301, 2
          %s303 = scalar_lea.vmem [#allocation2], %s302
          %304 = dma.done %s300, 32
        $region44: #{tpu_custom_call.1} parent=39 // pred_fallthru
          _
      $region40: #{tpu_custom_call.1} parent=5 // pred_fallthru
        _
    $region6: #{tpu_custom_call.1} parent=1 // loop_footer
      %s16 = sadd.s32 1, %s12
    $region7: #{tpu_custom_call.1} parent=1 // loop_footer_branch
      %11 = sbr.rel target = $region3
    $region8: #{tpu_custom_call.1} parent=1 // loop_exit
      _
    %305 = vsyncpa [#allocation3], 1
    %s306 = scalar_lea.sflag [#allocation3], 1
    %307 = vsyncpa %s306, 1

</llo_original>
